<compile_context>
chip_gen: v5e
topology: v5e:2x2
jax: 0.10.0
libtpu: 0.0.40
codegen_flags: <defaults>
</compile_context>

<pallas_src>
import functools

import jax
import jax.numpy as jnp
from jax.experimental import pallas as pl
from jax.experimental.pallas import tpu as pltpu

LANE = 128
SUBLANE_BF16 = 16


def _round_up(v, m):
    return (v + m - 1) // m * m


def _tpu_vmem_capacity_bytes():
    try:
        return int(pltpu.get_tpu_info().vmem_capacity_bytes)
    except Exception:
        return 64 * 1024 * 1024          # conservative fallback (v7x per-TC VMEM)


def _vmem_estimate_bytes(tb, th, kp, cp, op):
    patch = 2 * tb * th * kp * 2                      # double-buffered bf16 patch stream
    weights = kp * cp * 2 + cp * op * 2 + op * 4      # single-buffered residents
    acc = tb * 8 * cp * 4                             # pooled-sum accumulator
    interm = tb * th * cp * 4                         # post-conv f32 intermediate
    out = 2 * tb * op * 4
    return patch + weights + acc + interm + out


def _derive_spatial_tile(hw, tb, kp, cp, op, budget, max_hw_tile=None):
    """Largest sublane-friendly TH that fits the VMEM budget (HW is padded up to TH*n)."""
    hw16 = _round_up(hw, SUBLANE_BF16)
    cap = hw16 if max_hw_tile is None else min(hw16, _round_up(max_hw_tile, SUBLANE_BF16))
    for cand in (4096, 2048, 1024, 512, 256, 128, 64, 32, 16):
        th = min(cand, cap)
        if _vmem_estimate_bytes(tb, th, kp, cp, op) <= budget:
            return th
    return SUBLANE_BF16


# -----------------------------------------------------------------------------
# Fused kernel.  Per grid step (nb, t):
#     acc += vreg-wise row-group sum of relu( patches_tile @ Wconv_aug )
# and on the last spatial tile:
#     out[nb] = ((acc collapsed) / HW).bf16 @ Wfc + bfc
# -----------------------------------------------------------------------------
def fused_backbone_head_kernel(patches_ref, cw_ref, fw_ref, fb_ref,
                               out_ref, acc_ref, *, inv_hw):
    t = pl.program_id(1)

    @pl.when(t == 0)
    def _():
        acc_ref[...] = jnp.zeros_like(acc_ref)

    tb, th, kp = patches_ref.shape
    cp = cw_ref.shape[1]

    # (TB*TH, Kp) bf16 @ (Kp, Cp) bf16 -> f32 on the MXU; conv bias is folded
    # in (constant-1 patch column), so only ReLU remains on the VPU.
    p = patches_ref[...].reshape(tb * th, kp)
    h = jnp.dot(p, cw_ref[...], preferred_element_type=jnp.float32)
    h = jnp.maximum(h, 0.0)

    # Vreg-aligned pooled-sum update: reduce over whole 8-sublane row groups
    # (pure VPU adds, no per-tile XLU / 1-sublane RMW).
    acc_ref[...] += h.reshape(tb, th // 8, 8, cp).sum(axis=1)

    @pl.when(t == pl.num_programs(1) - 1)
    def _():
        # Single 8->1 sublane collapse, global-average-pool finalize (1/HW is
        # a compile-time constant over the REAL HW), then the replaced FC head
        # as a batched (TB, Cp) @ (Cp, Op) matmul in the epilogue.
        pooled = acc_ref[...].sum(axis=1) * inv_hw            # (TB, Cp) f32
        feats = pooled.astype(jnp.bfloat16)
        y = jnp.dot(feats, fw_ref[...], preferred_element_type=jnp.float32)
        out_ref[...] = y + fb_ref[...]                        # (TB, Op), lane-dense


def fused_forward(patches, conv_w, fc_w, fc_b, *, hw, tb, th, vmem_limit):
    npad, hwp, kp = patches.shape
    cp = conv_w.shape[1]
    op = fc_w.shape[1]

    cost = pl.CostEstimate(
        flops=2 * npad * hwp * kp * cp + 2 * npad * cp * op,
        transcendentals=0,
        bytes_accessed=(patches.nbytes + conv_w.nbytes + fc_w.nbytes
                        + fc_b.nbytes + npad * op * 4))

    return pl.pallas_call(
        functools.partial(fused_backbone_head_kernel, inv_hw=1.0 / hw),
        out_shape=jax.ShapeDtypeStruct((npad, op), jnp.float32),
        grid_spec=pltpu.PrefetchScalarGridSpec(
            num_scalar_prefetch=0,
            grid=(npad // tb, hwp // th),          # batch blocks (parallel), spatial (reduction)
            in_specs=[
                # streamed bf16 patch tiles
                pl.BlockSpec((tb, th, kp), lambda nb, t: (nb, t, 0)),
                # resident weights / bias: constant index maps -> single-buffered
                pl.BlockSpec((kp, cp), lambda nb, t: (0, 0),
                             pipeline_mode=pl.Buffered(1)),
                pl.BlockSpec((cp, op), lambda nb, t: (0, 0),
                             pipeline_mode=pl.Buffered(1)),
                pl.BlockSpec((1, op), lambda nb, t: (0, 0),
                             pipeline_mode=pl.Buffered(1)),
            ],
            # same output block across t -> resident; written only on last t
            out_specs=pl.BlockSpec((tb, op), lambda nb, t: (nb, 0)),
            scratch_shapes=[pltpu.VMEM((tb, 8, cp), jnp.float32)],   # pooled-sum acc
        ),
        compiler_params=pltpu.CompilerParams(
            dimension_semantics=("parallel", "arbitrary"),
            vmem_limit_bytes=vmem_limit),
        cost_estimate=cost,
    )(patches, conv_w, fc_w, fc_b)


# -----------------------------------------------------------------------------
# Glue: im2col patch extraction (3x3, stride 1, SAME padding).
# -----------------------------------------------------------------------------
def im2col_3x3(x_nhwc):
    N, H, W, C = x_nhwc.shape
    xp = jnp.pad(x_nhwc, ((0, 0), (1, 1), (1, 1), (0, 0)))
    taps = [xp[:, dy:dy + H, dx:dx + W, :] for dy in range(3) for dx in range(3)]
    patches = jnp.stack(taps, axis=3)              # (N, H, W, 9, C)
    return patches.reshape(N, H * W, 9 * C)        # (N, HW, 9*C)


class TransferNetworkPallas:
    """TransferNetwork forward: synthetic conv->ReLU->GAP backbone + replaced FC head.

    TODO(synk): the real module loads an arbitrary torch.hub backbone
    (ResNet/AlexNet/VGG) with pretrained weights; a deterministic single
    conv->relu->gap stage stands in as the backbone feeding the replaced FC head.
    """

    def __init__(self, S, B, nkpt, nc, require_kpt_conf, cin, num_features, key,
                 max_hw_tile=None):
        nkpt_dim = 3 if require_kpt_conf else 2
        self.out_features = S * S * (B * (5 + nkpt_dim * nkpt) + nc)
        self.num_features = num_features
        self.cin = cin
        self.max_hw_tile = max_hw_tile

        k1, k2, k3, k4 = jax.random.split(key, 4)
        conv_w = jax.random.normal(k1, (num_features, cin, 3, 3), jnp.float32) * 0.05
        conv_b = jax.random.normal(k2, (num_features,), jnp.float32) * 0.01
        fc_w = jax.random.normal(k3, (num_features, self.out_features),
                                 jnp.float32) * 0.05
        fc_b = jax.random.normal(k4, (self.out_features,), jnp.float32) * 0.01

        K = 9 * cin
        self.K1 = K + 1                                   # +1: folded conv-bias column
        self.Kp = _round_up(self.K1, LANE)                # lane-dense contraction
        self.Cp = _round_up(num_features, LANE)           # lane-dense feature width
        self.Op = _round_up(self.out_features, LANE)      # lane-dense output width

        # conv weight as a matmul matrix in (dy, dx, cin) patch order, with the
        # bias folded in as an extra row (matches the constant-1 patch column),
        # zero-padded to (Kp, Cp) and cast to bf16 (MXU-native).
        w_mat = jnp.transpose(conv_w, (2, 3, 1, 0)).reshape(K, num_features)
        w_aug = jnp.concatenate([w_mat, conv_b.reshape(1, num_features)], axis=0)
        self.conv_w_p = jnp.pad(
            w_aug, ((0, self.Kp - self.K1),
                    (0, self.Cp - num_features))).astype(jnp.bfloat16)

        self.fc_w_p = jnp.pad(
            fc_w, ((0, self.Cp - num_features),
                   (0, self.Op - self.out_features))).astype(jnp.bfloat16)
        self.fc_b_p = jnp.pad(fc_b, (0, self.Op - self.out_features)).reshape(1, self.Op)

    def _tiling(self, N, HW):
        TB = min(8, N)                                    # batch the FC-head epilogue
        cap = _tpu_vmem_capacity_bytes()
        vmem_limit = max(32 << 20, cap * 3 // 4)          # ~96 MiB v5e/v6e, ~48 MiB v7x
        budget = vmem_limit - (4 << 20)                   # headroom for Mosaic scratch
        TH = _derive_spatial_tile(HW, TB, self.Kp, self.Cp, self.Op, budget,
                                  self.max_hw_tile)
        return TB, TH, vmem_limit

    def __call__(self, x_nchw):
        N, _, H, W = x_nchw.shape
        HW = H * W
        TB, TH, vmem_limit = self._tiling(N, HW)
        Np = _round_up(N, TB)
        HWp = _round_up(HW, TH)

        # layout: NCHW (torch) -> NHWC (channels on the lane axis), then im2col.
        x = jnp.transpose(x_nchw, (0, 2, 3, 1))
        patches = im2col_3x3(x)                                   # (N, HW, 9*Cin)
        ones = jnp.ones((N, HW, 1), patches.dtype)                # folded-bias column
        patches = jnp.concatenate([patches, ones], axis=-1)       # (N, HW, K1)
        # zero-pad batch / spatial / contraction; padded rows give relu(0)=0,
        # so the pool sum (divided by the REAL HW) is unaffected.
        patches = jnp.pad(patches, ((0, Np - N), (0, HWp - HW),
                                    (0, self.Kp - self.K1))).astype(jnp.bfloat16)

        out_p = fused_forward(patches, self.conv_w_p, self.fc_w_p, self.fc_b_p,
                              hw=HW, tb=TB, th=TH, vmem_limit=vmem_limit)
        return out_p[:N, :self.out_features]

    def reference(self, x_nchw):
        """Pure-JAX forward with the same (bf16 multiply, f32 accumulate) numerics."""
        x = jnp.transpose(x_nchw, (0, 2, 3, 1))
        patches = im2col_3x3(x)
        N, HW, _ = patches.shape
        ones = jnp.ones((N, HW, 1), patches.dtype)
        p = jnp.concatenate([patches, ones], axis=-1)
        p = jnp.pad(p, ((0, 0), (0, 0), (0, self.Kp - self.K1))).astype(jnp.bfloat16)
        h = jnp.dot(p.reshape(N * HW, self.Kp), self.conv_w_p,
                    preferred_element_type=jnp.float32)
        h = jnp.maximum(h, 0.0).reshape(N, HW, self.Cp)
        feats = jnp.mean(h, axis=1).astype(jnp.bfloat16)          # (N, Cp)
        out = jnp.dot(feats, self.fc_w_p,
                      preferred_element_type=jnp.float32) + self.fc_b_p
        return out[:, :self.out_features]


if __name__ == "__main__":
    key = jax.random.PRNGKey(0)
    k_param, k_x = jax.random.split(key)

    # Small shapes consistent with the module's forward:
    #   batch=2, Cin=4, spatial 16x16; S=2, B=1, nkpt=4, nc=2, kpt-conf on
    #   -> out_features = 2*2*(1*(5 + 3*4) + 2) = 76  (padded to 128 internally)
    N, Cin, H, W = 2, 4, 16, 16
    net = TransferNetworkPallas(S=2, B=1, nkpt=4, nc=2, require_kpt_conf=True,
                                cin=Cin, num_features=32, key=k_param,
                                max_hw_tile=128)   # HW=256 -> 2 spatial tiles

    x = jax.random.normal(k_x, (N, Cin, H, W), jnp.float32)

    out = jax.block_until_ready(net(x))
    ref = net.reference(x)

    assert out.shape == (N, net.out_features), out.shape
    assert jnp.allclose(out, ref, atol=2e-3, rtol=1e-2), \
        float(jnp.max(jnp.abs(out - ref)))

    print("KERNEL_OK")
</pallas_src>

<mosaic_0001>
module attributes {stable_mosaic.version = 11 : i64} {
  func.func @fused_backbone_head_kernel(%arg0: i32, %arg1: i32, %arg2: memref<2x128x128xbf16, #tpu.memory_space<vmem>>, %arg3: memref<128x128xbf16, #tpu.memory_space<vmem>>, %arg4: memref<128x128xbf16, #tpu.memory_space<vmem>>, %arg5: memref<1x128xf32, #tpu.memory_space<vmem>>, %arg6: memref<2x128xf32, #tpu.memory_space<vmem>>, %arg7: memref<2x8x128xf32, #tpu.memory_space<vmem>>) attributes {dimension_semantics = [#tpu.dimension_semantics<parallel>, #tpu.dimension_semantics<arbitrary>], iteration_bounds = array<i64: 1, 2>, scalar_prefetch = 0 : i64, scratch_operands = 1 : i64, tpu.core_type = #tpu.core_type<tc>, window_params = [{transform_indices = @transform_0, window_bounds = array<i64: 2, 128, 128>}, {pipeline_mode = #tpu.pipeline_mode<synchronous>, transform_indices = @transform_1, window_bounds = array<i64: 128, 128>}, {pipeline_mode = #tpu.pipeline_mode<synchronous>, transform_indices = @transform_2, window_bounds = array<i64: 128, 128>}, {pipeline_mode = #tpu.pipeline_mode<synchronous>, transform_indices = @transform_3, window_bounds = array<i64: 1, 128>}, {transform_indices = @transform_4, window_bounds = array<i64: 2, 128>}]} {
    %c0_i32 = arith.constant 0 : i32
    %0 = arith.cmpi eq, %arg1, %c0_i32 : i32
    %1 = arith.extui %0 : i1 to i32
    %c0_i32_0 = arith.constant 0 : i32
    %2 = arith.cmpi ne, %1, %c0_i32_0 : i32
    scf.if %2 {
      %cst_14 = arith.constant 0.000000e+00 : f32
      %17 = vector.broadcast %cst_14 : f32 to vector<2x8x128xf32>
      %c0_15 = arith.constant 0 : index
      %c0_16 = arith.constant 0 : index
      %c0_17 = arith.constant 0 : index
      %18 = vector.load %arg7[%c0_15, %c0_16, %c0_17] : memref<2x8x128xf32, #tpu.memory_space<vmem>>, vector<2x8x128xf32>
      tpu.vector_store %arg7[%c0_15, %c0_16, %c0_17], %17 {strides = array<i32>} : memref<2x8x128xf32, #tpu.memory_space<vmem>>, vector<2x8x128xf32>,
    } else {
    }
    %c0 = arith.constant 0 : index
    %c0_1 = arith.constant 0 : index
    %c0_2 = arith.constant 0 : index
    %3 = vector.load %arg2[%c0, %c0_1, %c0_2] : memref<2x128x128xbf16, #tpu.memory_space<vmem>>, vector<2x128x128xbf16>
    %4 = vector.shape_cast %3 : vector<2x128x128xbf16> to vector<256x128xbf16>
    %c0_3 = arith.constant 0 : index
    %c0_4 = arith.constant 0 : index
    %5 = vector.load %arg3[%c0_3, %c0_4] : memref<128x128xbf16, #tpu.memory_space<vmem>>, vector<128x128xbf16>
    %cst = arith.constant dense<0.000000e+00> : vector<256x128xf32>
    %6 = tpu.matmul %4, %5, %cst {dimension_numbers = #tpu.dot_dimension_numbers<[1], [0], [0], [1], [0, 0, 1, 1], [], []>} : vector<256x128xbf16>, vector<128x128xbf16>, vector<256x128xf32> -> vector<256x128xf32>
    %cst_5 = arith.constant 0.000000e+00 : f32
    %7 = vector.broadcast %cst_5 : f32 to vector<256x128xf32>
    %8 = arith.maximumf %6, %7 : vector<256x128xf32>
    %c0_6 = arith.constant 0 : index
    %c0_7 = arith.constant 0 : index
    %c0_8 = arith.constant 0 : index
    %9 = vector.load %arg7[%c0_6, %c0_7, %c0_8] : memref<2x8x128xf32, #tpu.memory_space<vmem>>, vector<2x8x128xf32>
    %10 = vector.shape_cast %8 : vector<256x128xf32> to vector<2x16x8x128xf32>
    %cst_9 = arith.constant dense<0.000000e+00> : vector<2x8x128xf32>
    %11 = vector.multi_reduction <add>, %10, %cst_9 [1] : vector<2x16x8x128xf32> to vector<2x8x128xf32>
    %12 = arith.addf %9, %11 : vector<2x8x128xf32>
    %c0_10 = arith.constant 0 : index
    %c0_11 = arith.constant 0 : index
    %c0_12 = arith.constant 0 : index
    %13 = vector.load %arg7[%c0_10, %c0_11, %c0_12] : memref<2x8x128xf32, #tpu.memory_space<vmem>>, vector<2x8x128xf32>
    tpu.vector_store %arg7[%c0_10, %c0_11, %c0_12], %12 {strides = array<i32>} : memref<2x8x128xf32, #tpu.memory_space<vmem>>, vector<2x8x128xf32>,
    %c1_i32 = arith.constant 1 : i32
    %14 = arith.cmpi eq, %arg1, %c1_i32 : i32
    %15 = arith.extui %14 : i1 to i32
    %c0_i32_13 = arith.constant 0 : i32
    %16 = arith.cmpi ne, %15, %c0_i32_13 : i32
    scf.if %16 {
      %c0_14 = arith.constant 0 : index
      %c0_15 = arith.constant 0 : index
      %c0_16 = arith.constant 0 : index
      %17 = vector.load %arg7[%c0_14, %c0_15, %c0_16] : memref<2x8x128xf32, #tpu.memory_space<vmem>>, vector<2x8x128xf32>
      %cst_17 = arith.constant dense<0.000000e+00> : vector<2x128xf32>
      %18 = vector.multi_reduction <add>, %17, %cst_17 [1] : vector<2x8x128xf32> to vector<2x128xf32>
      %cst_18 = arith.constant 3.906250e-03 : f32
      %19 = vector.broadcast %cst_18 : f32 to vector<2x128xf32>
      %20 = arith.mulf %18, %19 : vector<2x128xf32>
      %21 = arith.truncf %20 : vector<2x128xf32> to vector<2x128xbf16>
      %c0_19 = arith.constant 0 : index
      %c0_20 = arith.constant 0 : index
      %22 = vector.load %arg4[%c0_19, %c0_20] : memref<128x128xbf16, #tpu.memory_space<vmem>>, vector<128x128xbf16>
      %cst_21 = arith.constant dense<0.000000e+00> : vector<2x128xf32>
      %23 = tpu.matmul %21, %22, %cst_21 {dimension_numbers = #tpu.dot_dimension_numbers<[1], [0], [0], [1], [0, 0, 1, 1], [], []>} : vector<2x128xbf16>, vector<128x128xbf16>, vector<2x128xf32> -> vector<2x128xf32>
      %c0_22 = arith.constant 0 : index
      %c0_23 = arith.constant 0 : index
      %24 = vector.load %arg5[%c0_22, %c0_23] : memref<1x128xf32, #tpu.memory_space<vmem>>, vector<1x128xf32>
      %25 = vector.broadcast %24 : vector<1x128xf32> to vector<2x128xf32>
      %26 = arith.addf %23, %25 : vector<2x128xf32>
      %c0_24 = arith.constant 0 : index
      %c0_25 = arith.constant 0 : index
      %27 = vector.load %arg6[%c0_24, %c0_25] : memref<2x128xf32, #tpu.memory_space<vmem>>, vector<2x128xf32>
      tpu.vector_store %arg6[%c0_24, %c0_25], %26 {strides = array<i32>} : memref<2x128xf32, #tpu.memory_space<vmem>>, vector<2x128xf32>,
    } else {
    }
    return
  }
  func.func @transform_0(%arg0: i32, %arg1: i32) -> (i32, i32, i32) {
    %c0_i32 = arith.constant 0 : i32
    %c0_i32_0 = arith.constant 0 : i32
    return %arg0, %arg1, %c0_i32 : i32, i32, i32
  }
  func.func @transform_1(%arg0: i32, %arg1: i32) -> (i32, i32) {
    %c0_i32 = arith.constant 0 : i32
    %c0_i32_0 = arith.constant 0 : i32
    %c0_i32_1 = arith.constant 0 : i32
    return %c0_i32, %c0_i32_0 : i32, i32
  }
  func.func @transform_2(%arg0: i32, %arg1: i32) -> (i32, i32) {
    %c0_i32 = arith.constant 0 : i32
    %c0_i32_0 = arith.constant 0 : i32
    %c0_i32_1 = arith.constant 0 : i32
    return %c0_i32, %c0_i32_0 : i32, i32
  }
  func.func @transform_3(%arg0: i32, %arg1: i32) -> (i32, i32) {
    %c0_i32 = arith.constant 0 : i32
    %c0_i32_0 = arith.constant 0 : i32
    %c0_i32_1 = arith.constant 0 : i32
    return %c0_i32, %c0_i32_0 : i32, i32
  }
  func.func @transform_4(%arg0: i32, %arg1: i32) -> (i32, i32) {
    %c0_i32 = arith.constant 0 : i32
    %c0_i32_0 = arith.constant 0 : i32
    return %arg0, %c0_i32 : i32, i32
  }
}

</mosaic_0001>

<llo_original>
// kernel: tpu_custom_call.1
$region0: #{tpu_custom_call.1}
  #allocation0 [shape = 'u32[]', space=smem, size = 0x4, offset = 0x4, fixed_abs, tag = 'smem constant byte address 0x4 - core index']
  #allocation1 [shape = 'u32[72,128]{1,0:T(1,128)}', space=vmem, size = 0x9000, scoped, tag = 'internal scratch']
  #allocation2 [shape = 'f32[2,8,128]{2,1,0:T(8,128)}', space=vmem, size = 0x2000, scoped, tag = 'scratch operand']
  #allocation10 [shape = 's32[]', space=sflag, size = 0x4, offset = 0, fixed_abs, tag = 'sflag constant byte address 0x0 - dummy sync flag']
  %s0 = inlined_call_operand.hbm [shape: bf16[2,256,128], index: 0, kind: input, shape index: {}]
  %s1 = inlined_call_operand.hbm [shape: bf16[128,128], index: 1, kind: input, shape index: {}]
  %s2 = inlined_call_operand.hbm [shape: bf16[128,128], index: 2, kind: input, shape index: {}]
  %s3 = inlined_call_operand.vmem [shape: f32[1,128], index: 3, kind: input, shape index: {}]
  %s4 = inlined_call_operand.hbm [shape: f32[2,128], index: 4, kind: output, shape index: {}]
  %s5 = sld [smem:[#allocation0]]
  $region69: #{tpu_custom_call.1} parent=0
    _
  %s7 = ssub.s32 1, %s5
  %s8 = scalar_select 0, %s7, %s5
  $region1: #{tpu_custom_call.1} parent=0
    #allocation3 [shape = 'u8[131072]{0}', space=vmem, size = 0x20000, scoped, tag = 'input window, operand 0']
    #allocation4 [shape = 's32[2]{0}', space=sflag, size = 0x8, scoped, tag = 'scoped memory for tpu_custom_call.1']
    #allocation5 [shape = 's32[2]{0}', space=sflag, size = 0x8, scoped, tag = 'scoped memory for tpu_custom_call.1']
    #allocation6 [shape = 'u8[32768]{0}', space=vmem, size = 0x8000, scoped, tag = 'input window, operand 1, single buffered']
    #allocation7 [shape = 's32[1]{0}', space=sflag, size = 0x4, scoped, tag = 'scoped memory for tpu_custom_call.1']
    #allocation8 [shape = 'u8[32768]{0}', space=vmem, size = 0x8000, scoped, tag = 'input window, operand 2, single buffered']
    #allocation9 [shape = 'u8[1024]{0}', space=vmem, size = 0x400, scoped, tag = 'output window, operand 0, single buffered']
    %9 = vsyncpa [#allocation4], 0
    %s10 = scalar_lea.sflag [#allocation4], 1
    %11 = vsyncpa %s10, 0
    %12 = vsyncpa [#allocation7], 0
    %13 = vsyncpa [#allocation5], 0
    loop: start=0, step=1, limit=4
    $region2: #{tpu_custom_call.1} parent=1 // loop_pre_header
      _
    $region3: #{tpu_custom_call.1} parent=1 // loop_header
      %s15 = sphi 0, %s19
      %p16 = scmp.ge.s32.totalorder %s15, 4
      %s22 = sphi 0, %s34
      %s23 = sphi 0, %s30
      %s24 = sphi 0, %s22
      %s25 = sphi 0, %s23
      %s26 = sphi 0, %s24
      %s27 = sphi 0, %s25
      %s39 = sphi 0, %s41
      %s42 = sphi 0, %s39
      %s43 = sphi 0, %s42
      %s59 = sphi 0, %s43
      %s63 = sphi 0, %s63
      %s65 = sphi 0, %s63
      %s66 = sphi 0, %s65
      %s80 = sphi 0, %s66
      %s84 = sphi 0, %s84
      %s86 = sphi 0, %s84
      %s87 = sphi 0, %s86
      %s101 = sphi 0, %s87
      %s105 = sphi 0, %s105
      %s107 = sphi 0, %s105
      %s108 = sphi 0, %s107
      %s122 = sphi 0, %s108
      %s128 = sphi 0, %s130
      %s131 = sphi 0, %s128
      %s132 = sphi 0, %s131
      %s148 = sphi 0, %s132
    $region4: #{tpu_custom_call.1} parent=1 // loop_header_branch
      %18 = sbr.rel (%p16) target = $region8
    $region5: #{tpu_custom_call.1} parent=1 // loop_body
      %s20 = ssub.s32 %s15, 1
      %s21 = ssub.s32 %s15, 2
      %s28 = sadd.s32 1, %s23
      %p29 = scmp.ge.s32.totalorder %s28, 2
      %s30 = scalar_select %p29, 0, %s28
      %s31 = sadd.s32 1, %s22
      %s32 = scalar_select %p29, %s31, %s22
      %p33 = scmp.ge.s32.totalorder %s32, 1
      %s34 = scalar_select %p33, 0, %s32
      %s35 = ssub.s32 %s22, %s34
      %s36 = ssub.s32 %s23, %s30
      %s37 = sor.u32 %s35, %s36
      %p38 = scmp.eq.s32.totalorder %s37, 0
      %s40 = sadd.s32 %s39, 1
      %s41 = scalar_select %p38, %s39, %s40
      %p44 = pneg %p38
      %p45 = scmp.eq.s32.totalorder %s15, 1
      %p46 = por %p44, %p45
      %p47 = scmp.ne.s32.totalorder %s39, %s42
      %p48 = scmp.eq.s32.totalorder %s15, 0
      %p49 = por %p47, %p48
      %p50 = scmp.ne.s32.totalorder %s39, %s42
      %p51 = scmp.eq.s32.totalorder %s20, 1
      %p52 = por %p50, %p51
      %p53 = scmp.ne.s32.totalorder %s42, %s43
      %p54 = scmp.eq.s32.totalorder %s20, 0
      %p55 = por %p53, %p54
      %p56 = scmp.ne.s32.totalorder %s42, %s43
      %p57 = scmp.eq.s32.totalorder %s21, 1
      %p58 = por %p56, %p57
      %p60 = scmp.ne.s32.totalorder %s43, %s59
      %p61 = scmp.eq.s32.totalorder %s21, 0
      %p62 = por %p60, %p61
      %s64 = sadd.s32 %s63, 1
      %p67 = scmp.eq.s32.totalorder %s15, 1
      %p68 = scmp.ne.s32.totalorder %s63, %s65
      %p69 = scmp.eq.s32.totalorder %s15, 0
      %p70 = por %p68, %p69
      %p71 = scmp.ne.s32.totalorder %s63, %s65
      %p72 = scmp.eq.s32.totalorder %s20, 1
      %p73 = por %p71, %p72
      %p74 = scmp.ne.s32.totalorder %s65, %s66
      %p75 = scmp.eq.s32.totalorder %s20, 0
      %p76 = por %p74, %p75
      %p77 = scmp.ne.s32.totalorder %s65, %s66
      %p78 = scmp.eq.s32.totalorder %s21, 1
      %p79 = por %p77, %p78
      %p81 = scmp.ne.s32.totalorder %s66, %s80
      %p82 = scmp.eq.s32.totalorder %s21, 0
      %p83 = por %p81, %p82
      %s85 = sadd.s32 %s84, 1
      %p88 = scmp.eq.s32.totalorder %s15, 1
      %p89 = scmp.ne.s32.totalorder %s84, %s86
      %p90 = scmp.eq.s32.totalorder %s15, 0
      %p91 = por %p89, %p90
      %p92 = scmp.ne.s32.totalorder %s84, %s86
      %p93 = scmp.eq.s32.totalorder %s20, 1
      %p94 = por %p92, %p93
      %p95 = scmp.ne.s32.totalorder %s86, %s87
      %p96 = scmp.eq.s32.totalorder %s20, 0
      %p97 = por %p95, %p96
      %p98 = scmp.ne.s32.totalorder %s86, %s87
      %p99 = scmp.eq.s32.totalorder %s21, 1
      %p100 = por %p98, %p99
      %p102 = scmp.ne.s32.totalorder %s87, %s101
      %p103 = scmp.eq.s32.totalorder %s21, 0
      %p104 = por %p102, %p103
      %s106 = sadd.s32 %s105, 1
      %p109 = scmp.eq.s32.totalorder %s15, 1
      %p110 = scmp.ne.s32.totalorder %s105, %s107
      %p111 = scmp.eq.s32.totalorder %s15, 0
      %p112 = por %p110, %p111
      %p113 = scmp.ne.s32.totalorder %s105, %s107
      %p114 = scmp.eq.s32.totalorder %s20, 1
      %p115 = por %p113, %p114
      %p116 = scmp.ne.s32.totalorder %s107, %s108
      %p117 = scmp.eq.s32.totalorder %s20, 0
      %p118 = por %p116, %p117
      %p119 = scmp.ne.s32.totalorder %s107, %s108
      %p120 = scmp.eq.s32.totalorder %s21, 1
      %p121 = por %p119, %p120
      %p123 = scmp.ne.s32.totalorder %s108, %s122
      %p124 = scmp.eq.s32.totalorder %s21, 0
      %p125 = por %p123, %p124
      %s126 = ssub.s32 %s22, %s34
      %p127 = scmp.eq.s32.totalorder %s126, 0
      %s129 = sadd.s32 %s128, 1
      %s130 = scalar_select %p127, %s128, %s129
      %p133 = pneg %p127
      %p134 = scmp.eq.s32.totalorder %s15, 1
      %p135 = por %p133, %p134
      %p136 = scmp.ne.s32.totalorder %s128, %s131
      %p137 = scmp.eq.s32.totalorder %s15, 0
      %p138 = por %p136, %p137
      %p139 = scmp.ne.s32.totalorder %s128, %s131
      %p140 = scmp.eq.s32.totalorder %s20, 1
      %p141 = por %p139, %p140
      %p142 = scmp.ne.s32.totalorder %s131, %s132
      %p143 = scmp.eq.s32.totalorder %s20, 0
      %p144 = por %p142, %p143
      %p145 = scmp.ne.s32.totalorder %s131, %s132
      %p146 = scmp.eq.s32.totalorder %s21, 1
      %p147 = por %p145, %p146
      %p149 = scmp.ne.s32.totalorder %s132, %s148
      %p150 = scmp.eq.s32.totalorder %s21, 0
      %p151 = por %p149, %p150
      %p152 = scmp.le.s32.totalorder 1, %s15
      %p153 = scmp.lt.s32.totalorder %s15, 3
      %p154 = pnand %p152, %p153
      %p155 = pneg %p154
      // Predicated region
      $region9: #{tpu_custom_call.1} parent=5 // pred_check
        _
      $region10: #{tpu_custom_call.1} parent=5 // pred_check_branch
        %157 = sbr.rel (%p154) target = $region12
      $region11: #{tpu_custom_call.1} parent=5 // pred_region
        %s158 = ssub.s32 %s15, 1
        // Predicated region
        $region13: #{tpu_custom_call.1} parent=11 // pred_check
          %p159 = pneg %p76
        $region14: #{tpu_custom_call.1} parent=11 // pred_check_branch
          %161 = sbr.rel (%p159) target = $region16
        $region15: #{tpu_custom_call.1} parent=11 // pred_region
          %163 = vsyncadd [#allocation7], 0
          %s164 = sshll.u32 %s1, 4
          %s165 = int_to_ptr.hbm [resolvable:$true] %s164
          %s166 = sshll.u32 [#allocation6], 4
          %s167 = int_to_ptr.vmem [resolvable:$true] %s166
          %172 = dma.hbm_to_vmem [thread:$0]  %s165, 1024, %s167, [#allocation7], 64, 64, 4
        $region16: #{tpu_custom_call.1} parent=11 // pred_fallthru
          _
        // Predicated region
        $region17: #{tpu_custom_call.1} parent=11 // pred_check
          %p173 = pneg %p97
        $region18: #{tpu_custom_call.1} parent=11 // pred_check_branch
          %175 = sbr.rel (%p173) target = $region20
        $region19: #{tpu_custom_call.1} parent=11 // pred_region
          %177 = vsyncadd [#allocation7], 0
          %s178 = sshll.u32 %s2, 4
          %s179 = int_to_ptr.hbm [resolvable:$true] %s178
          %s180 = sshll.u32 [#allocation8], 4
          %s181 = int_to_ptr.vmem [resolvable:$true] %s180
          %186 = dma.hbm_to_vmem [thread:$0]  %s179, 1024, %s181, [#allocation7], 64, 64, 4
        $region20: #{tpu_custom_call.1} parent=11 // pred_fallthru
          _
        // Predicated region
        $region21: #{tpu_custom_call.1} parent=11 // pred_check
          %p187 = pneg %p118
        $region22: #{tpu_custom_call.1} parent=11 // pred_check_branch
          %189 = sbr.rel (%p187) target = $region24
        $region23: #{tpu_custom_call.1} parent=11 // pred_region
          _
        $region24: #{tpu_custom_call.1} parent=11 // pred_fallthru
          _
      $region12: #{tpu_custom_call.1} parent=5 // pred_fallthru
        _
      %p190 = scmp.lt.s32.totalorder %s15, 2
      // Predicated region
      $region25: #{tpu_custom_call.1} parent=5 // pred_check
        %p191 = pneg %p190
      $region26: #{tpu_custom_call.1} parent=5 // pred_check_branch
        %193 = sbr.rel (%p191) target = $region28
      $region27: #{tpu_custom_call.1} parent=5 // pred_region
        // Predicated region
        $region29: #{tpu_custom_call.1} parent=27 // pred_check
          %p194 = pneg %p49
        $region30: #{tpu_custom_call.1} parent=27 // pred_check_branch
          %196 = sbr.rel (%p194) target = $region32
        $region31: #{tpu_custom_call.1} parent=27 // pred_region
          #allocation11 [shape = 'u32[6]{0}', space=smem, size = 0x18, scoped, tag = 'DMA stride descriptor']
          %s197 = sand.u32 %s39, 1
          %s198 = scalar_lea.sflag [#allocation4], %s197
          %s199 = sand.u32 %s39, 1
          %s200 = smul.addr %s199, 128
          %s201 = scalar_lea.vmem [#allocation3], %s200
          %s202 = smul.u32 2, %s22
          %s203 = smul.u32 16, %s23
          %205 = vsyncadd %s198, 0
          %s206 = smul.addr %s202, 32
          %s207 = sadd.s32 %s203, %s206
          %s208 = smul.addr %s207, 4
          %s209 = scalar_lea.hbm %s0, %s208
          %s211 = sshll.u32 1, 14
          %s212 = sxor.u32 4294967295, %s211
          %s214 = sld [smem:[#allocation0]]
          %s215 = sadd.s32 2, %s214
          %s217 = sshll.u32 7, 26
          %s218 = sxor.u32 4294967295, %s217
          %s219 = sand.u32 0, %s218
          %s220 = sshll.u32 %s215, 26
          %s221 = sor.u32 %s219, %s220
          %s222 = sshll.u32 %s209, 4
          %s223 = int_to_ptr.hbm [resolvable:$true] %s222
          %s224 = sshll.u32 %s201, 4
          %s225 = int_to_ptr.vmem [resolvable:$true] %s224
          %231 = sst [smem:[#allocation11]] 2048
          %s232 = scalar_lea.smem [#allocation11], 1
          %233 = sst [smem:[%s232]] 1024
          %s234 = scalar_lea.smem [#allocation11], 2
          %235 = sst [smem:[%s234]] 16
          %s236 = scalar_lea.smem [#allocation11], 3
          %237 = sst [smem:[%s236]] 64
          %s238 = scalar_lea.smem [#allocation11], 4
          %239 = sst [smem:[%s238]] 64
          %s240 = scalar_lea.smem [#allocation11], 5
          %241 = sst [smem:[%s240]] 4
          %243 = dma.general %s223, 2048, %s225, %s198, [#allocation10], [#allocation11], %s221, 0
        $region32: #{tpu_custom_call.1} parent=27 // pred_fallthru
          _
      $region28: #{tpu_custom_call.1} parent=5 // pred_fallthru
        _
      %p244 = scmp.le.s32.totalorder 1, %s15
      %p245 = scmp.lt.s32.totalorder %s15, 3
      %p246 = pnand %p244, %p245
      %p247 = pneg %p246
      // Predicated region
      $region33: #{tpu_custom_call.1} parent=5 // pred_check
        _
      $region34: #{tpu_custom_call.1} parent=5 // pred_check_branch
        %249 = sbr.rel (%p246) target = $region36
      $region35: #{tpu_custom_call.1} parent=5 // pred_region
        %s250 = ssub.s32 %s15, 1
        %s251 = sand.u32 %s42, 1
        %s252 = scalar_lea.sflag [#allocation4], %s251
        %s253 = sand.u32 %s42, 1
        %s254 = smul.addr %s253, 128
        %s255 = scalar_lea.vmem [#allocation3], %s254
        // Predicated region
        $region37: #{tpu_custom_call.1} parent=35 // pred_check
          %p256 = pneg %p55
        $region38: #{tpu_custom_call.1} parent=35 // pred_check_branch
          %258 = sbr.rel (%p256) target = $region40
        $region39: #{tpu_custom_call.1} parent=35 // pred_region
          %260 = dma.done %s252, 2048
        $region40: #{tpu_custom_call.1} parent=35 // pred_fallthru
          _
        // Predicated region
        $region41: #{tpu_custom_call.1} parent=35 // pred_check
          %p261 = pneg %p76
        $region42: #{tpu_custom_call.1} parent=35 // pred_check_branch
          %263 = sbr.rel (%p261) target = $region44
        $region43: #{tpu_custom_call.1} parent=35 // pred_region
          %265 = dma.done [#allocation7], 1024
        $region44: #{tpu_custom_call.1} parent=35 // pred_fallthru
          _
        // Predicated region
        $region45: #{tpu_custom_call.1} parent=35 // pred_check
          %p266 = pneg %p97
        $region46: #{tpu_custom_call.1} parent=35 // pred_check_branch
          %268 = sbr.rel (%p266) target = $region48
        $region47: #{tpu_custom_call.1} parent=35 // pred_region
          %270 = dma.done [#allocation7], 1024
        $region48: #{tpu_custom_call.1} parent=35 // pred_fallthru
          _
        %s271 = sand.u32 %s42, 1
        %s272 = scalar_lea.sflag [#allocation4], %s271
        %s273 = sand.u32 %s42, 1
        %s274 = smul.addr %s273, 128
        %s275 = scalar_lea.vmem [#allocation3], %s274
        %p276 = pneg %p55
        %p277 = pneg %p52
        %p278 = pneg %p76
        %p279 = pneg %p73
        %p280 = pneg %p97
        %p281 = pneg %p94
        %p282 = pneg %p118
        %p283 = pneg %p115
        %p284 = pneg %p144
        %p285 = pneg %p141
        %s286 = smul.u32 2, %s24
        %s287 = smul.u32 16, %s25
        %p288 = scmp.eq.s32.totalorder %s25, 0
        // Predicated region
        $region49: #{tpu_custom_call.1} parent=35 // pred_check
          %p289 = pneg %p288
        $region50: #{tpu_custom_call.1} parent=35 // pred_check_branch
          %291 = sbr.rel (%p289) target = $region52
        $region51: #{tpu_custom_call.1} parent=35 // pred_region
          %292 = vst [vmem:[#allocation2] sm:$0xff] 0.0
          %293 = vst [vmem:[#allocation2 + $0x8] sm:$0xff] 0.0
        $region52: #{tpu_custom_call.1} parent=35 // pred_fallthru
          _
        %v294 = vld [vmem:[%s255] sm:$0xf]
        %v295 = vld [vmem:[%s255 + $0x4] sm:$0xf]
        %v296 = vld [vmem:[%s255 + $0x8] sm:$0xf]
        %v297 = vld [vmem:[%s255 + $0xc] sm:$0xf]
        %v298 = vld [vmem:[%s255 + $0x10] sm:$0xf]
        %v299 = vld [vmem:[%s255 + $0x14] sm:$0xf]
        %v300 = vld [vmem:[%s255 + $0x18] sm:$0xf]
        %v301 = vld [vmem:[%s255 + $0x1c] sm:$0xf]
        %v302 = vld [vmem:[%s255 + $0x20] sm:$0xf]
        %v303 = vld [vmem:[%s255 + $0x24] sm:$0xf]
        %v304 = vld [vmem:[%s255 + $0x28] sm:$0xf]
        %v305 = vld [vmem:[%s255 + $0x2c] sm:$0xf]
        %v306 = vld [vmem:[%s255 + $0x30] sm:$0xf]
        %v307 = vld [vmem:[%s255 + $0x34] sm:$0xf]
        %v308 = vld [vmem:[%s255 + $0x38] sm:$0xf]
        %v309 = vld [vmem:[%s255 + $0x3c] sm:$0xf]
        %v310 = vld [vmem:[%s255 + $0x40] sm:$0xf]
        %v311 = vld [vmem:[%s255 + $0x44] sm:$0xf]
        %v312 = vld [vmem:[%s255 + $0x48] sm:$0xf]
        %v313 = vld [vmem:[%s255 + $0x4c] sm:$0xf]
        %v314 = vld [vmem:[%s255 + $0x50] sm:$0xf]
        %v315 = vld [vmem:[%s255 + $0x54] sm:$0xf]
        %v316 = vld [vmem:[%s255 + $0x58] sm:$0xf]
        %v317 = vld [vmem:[%s255 + $0x5c] sm:$0xf]
        %v318 = vld [vmem:[%s255 + $0x60] sm:$0xf]
        %v319 = vld [vmem:[%s255 + $0x64] sm:$0xf]
        %v320 = vld [vmem:[%s255 + $0x68] sm:$0xf]
        %v321 = vld [vmem:[%s255 + $0x6c] sm:$0xf]
        %v322 = vld [vmem:[%s255 + $0x70] sm:$0xf]
        %v323 = vld [vmem:[%s255 + $0x74] sm:$0xf]
        %v324 = vld [vmem:[%s255 + $0x78] sm:$0xf]
        %v325 = vld [vmem:[%s255 + $0x7c] sm:$0xf]
        %v326 = vld [vmem:[#allocation6] sm:$0xf]
        %v327 = vld [vmem:[#allocation6 + $0x4] sm:$0xf]
        %v328 = vld [vmem:[#allocation6 + $0x8] sm:$0xf]
        %v329 = vld [vmem:[#allocation6 + $0xc] sm:$0xf]
        %v330 = vld [vmem:[#allocation6 + $0x10] sm:$0xf]
        %v331 = vld [vmem:[#allocation6 + $0x14] sm:$0xf]
        %v332 = vld [vmem:[#allocation6 + $0x18] sm:$0xf]
        %v333 = vld [vmem:[#allocation6 + $0x1c] sm:$0xf]
        %v334 = vld [vmem:[#allocation6 + $0x20] sm:$0xf]
        %v335 = vld [vmem:[#allocation6 + $0x24] sm:$0xf]
        %v336 = vld [vmem:[#allocation6 + $0x28] sm:$0xf]
        %v337 = vld [vmem:[#allocation6 + $0x2c] sm:$0xf]
        %v338 = vld [vmem:[#allocation6 + $0x30] sm:$0xf]
        %v339 = vld [vmem:[#allocation6 + $0x34] sm:$0xf]
        %v340 = vld [vmem:[#allocation6 + $0x38] sm:$0xf]
        %v341 = vld [vmem:[#allocation6 + $0x3c] sm:$0xf]
        %v374 = vunpack.c.l.b16 %v294
        %v375 = vunpack.c.l.b16 %v295
        %v376 = vunpack.c.l.b16 %v296
        %v377 = vunpack.c.l.b16 %v297
        %v378 = vunpack.c.l.b16 %v298
        %v379 = vunpack.c.l.b16 %v299
        %v380 = vunpack.c.l.b16 %v300
        %v381 = vunpack.c.l.b16 %v301
        %v382 = vunpack.c.l.b16 %v302
        %v383 = vunpack.c.l.b16 %v303
        %v384 = vunpack.c.l.b16 %v304
        %v385 = vunpack.c.l.b16 %v305
        %v386 = vunpack.c.l.b16 %v306
        %v387 = vunpack.c.l.b16 %v307
        %v388 = vunpack.c.l.b16 %v308
        %v389 = vunpack.c.l.b16 %v309
        %v390 = vunpack.c.l.b16 %v310
        %v391 = vunpack.c.l.b16 %v311
        %v392 = vunpack.c.l.b16 %v312
        %v393 = vunpack.c.l.b16 %v313
        %v394 = vunpack.c.l.b16 %v314
        %v395 = vunpack.c.l.b16 %v315
        %v396 = vunpack.c.l.b16 %v316
        %v397 = vunpack.c.l.b16 %v317
        %v398 = vunpack.c.l.b16 %v318
        %v399 = vunpack.c.l.b16 %v319
        %v400 = vunpack.c.l.b16 %v320
        %v401 = vunpack.c.l.b16 %v321
        %v402 = vunpack.c.l.b16 %v322
        %v403 = vunpack.c.l.b16 %v323
        %v404 = vunpack.c.l.b16 %v324
        %v405 = vunpack.c.l.b16 %v325
        %v406 = vpack.c.b16 %v375, %v374
        %v407 = vpack.c.b16 %v377, %v376
        %v408 = vpack.c.b16 %v379, %v378
        %v409 = vpack.c.b16 %v381, %v380
        %v410 = vpack.c.b16 %v383, %v382
        %v411 = vpack.c.b16 %v385, %v384
        %v412 = vpack.c.b16 %v387, %v386
        %v413 = vpack.c.b16 %v389, %v388
        %v414 = vpack.c.b16 %v391, %v390
        %v415 = vpack.c.b16 %v393, %v392
        %v416 = vpack.c.b16 %v395, %v394
        %v417 = vpack.c.b16 %v397, %v396
        %v418 = vpack.c.b16 %v399, %v398
        %v419 = vpack.c.b16 %v401, %v400
        %v420 = vpack.c.b16 %v403, %v402
        %v421 = vpack.c.b16 %v405, %v404
        %v454 = vunpack.c.l.b16 %v326
        %v455 = vunpack.c.l.b16 %v327
        %v456 = vunpack.c.l.b16 %v328
        %v457 = vunpack.c.l.b16 %v329
        %v458 = vunpack.c.l.b16 %v330
        %v459 = vunpack.c.l.b16 %v331
        %v460 = vunpack.c.l.b16 %v332
        %v461 = vunpack.c.l.b16 %v333
        %v462 = vunpack.c.l.b16 %v334
        %v463 = vunpack.c.l.b16 %v335
        %v464 = vunpack.c.l.b16 %v336
        %v465 = vunpack.c.l.b16 %v337
        %v466 = vunpack.c.l.b16 %v338
        %v467 = vunpack.c.l.b16 %v339
        %v468 = vunpack.c.l.b16 %v340
        %v469 = vunpack.c.l.b16 %v341
        %v470 = vpack.c.b16 %v455, %v454
        %v471 = vpack.c.b16 %v457, %v456
        %v472 = vpack.c.b16 %v459, %v458
        %v473 = vpack.c.b16 %v461, %v460
        %v474 = vpack.c.b16 %v463, %v462
        %v475 = vpack.c.b16 %v465, %v464
        %v476 = vpack.c.b16 %v467, %v466
        %v477 = vpack.c.b16 %v469, %v468
        %486 = vmatpush.bf16.msra.mxu0 %v477
        %487 = vmatpush.bf16.msra.mxu0 %v476
        %488 = vmatpush.bf16.msra.mxu0 %v475
        %489 = vmatpush.bf16.msra.mxu0 %v474
        %490 = vmatpush.bf16.msra.mxu0 %v473
        %491 = vmatpush.bf16.msra.mxu0 %v472
        %492 = vmatpush.bf16.msra.mxu0 %v471
        %493 = vmatpush.bf16.msra.mxu0 %v470
        %494 = vmatmul.bf16.gmra.mxu0 %v406
        %v495 = vpop.f32.mrf.mxu0
        %v496 = vadd.f32 0.0, %v495
        %v497 = vpop.f32.mrf.mxu0
        %v498 = vadd.f32 0.0, %v497
        %499 = vmatmul.bf16.gmra.mxu0 %v407
        %v500 = vpop.f32.mrf.mxu0
        %v501 = vadd.f32 0.0, %v500
        %v502 = vpop.f32.mrf.mxu0
        %v503 = vadd.f32 0.0, %v502
        %504 = vmatmul.bf16.gmra.mxu0 %v408
        %v505 = vpop.f32.mrf.mxu0
        %v506 = vadd.f32 0.0, %v505
        %v507 = vpop.f32.mrf.mxu0
        %v508 = vadd.f32 0.0, %v507
        %509 = vmatmul.bf16.gmra.mxu0 %v409
        %v510 = vpop.f32.mrf.mxu0
        %v511 = vadd.f32 0.0, %v510
        %v512 = vpop.f32.mrf.mxu0
        %v513 = vadd.f32 0.0, %v512
        %514 = vmatmul.bf16.gmra.mxu0 %v410
        %v515 = vpop.f32.mrf.mxu0
        %v516 = vadd.f32 0.0, %v515
        %v517 = vpop.f32.mrf.mxu0
        %v518 = vadd.f32 0.0, %v517
        %519 = vmatmul.bf16.gmra.mxu0 %v411
        %v520 = vpop.f32.mrf.mxu0
        %v521 = vadd.f32 0.0, %v520
        %v522 = vpop.f32.mrf.mxu0
        %v523 = vadd.f32 0.0, %v522
        %524 = vmatmul.bf16.gmra.mxu0 %v412
        %v525 = vpop.f32.mrf.mxu0
        %v526 = vadd.f32 0.0, %v525
        %v527 = vpop.f32.mrf.mxu0
        %v528 = vadd.f32 0.0, %v527
        %529 = vmatmul.bf16.gmra.mxu0 %v413
        %v530 = vpop.f32.mrf.mxu0
        %v531 = vadd.f32 0.0, %v530
        %v532 = vpop.f32.mrf.mxu0
        %v533 = vadd.f32 0.0, %v532
        %534 = vmatmul.bf16.gmra.mxu0 %v414
        %v535 = vpop.f32.mrf.mxu0
        %v536 = vadd.f32 0.0, %v535
        %v537 = vpop.f32.mrf.mxu0
        %v538 = vadd.f32 0.0, %v537
        %539 = vmatmul.bf16.gmra.mxu0 %v415
        %v540 = vpop.f32.mrf.mxu0
        %v541 = vadd.f32 0.0, %v540
        %v542 = vpop.f32.mrf.mxu0
        %v543 = vadd.f32 0.0, %v542
        %544 = vmatmul.bf16.gmra.mxu0 %v416
        %v545 = vpop.f32.mrf.mxu0
        %v546 = vadd.f32 0.0, %v545
        %v547 = vpop.f32.mrf.mxu0
        %v548 = vadd.f32 0.0, %v547
        %549 = vmatmul.bf16.gmra.mxu0 %v417
        %v550 = vpop.f32.mrf.mxu0
        %v551 = vadd.f32 0.0, %v550
        %v552 = vpop.f32.mrf.mxu0
        %v553 = vadd.f32 0.0, %v552
        %554 = vmatmul.bf16.gmra.mxu0 %v418
        %v555 = vpop.f32.mrf.mxu0
        %v556 = vadd.f32 0.0, %v555
        %v557 = vpop.f32.mrf.mxu0
        %v558 = vadd.f32 0.0, %v557
        %559 = vmatmul.bf16.gmra.mxu0 %v419
        %v560 = vpop.f32.mrf.mxu0
        %v561 = vadd.f32 0.0, %v560
        %v562 = vpop.f32.mrf.mxu0
        %v563 = vadd.f32 0.0, %v562
        %564 = vmatmul.bf16.gmra.mxu0 %v420
        %v565 = vpop.f32.mrf.mxu0
        %v566 = vadd.f32 0.0, %v565
        %v567 = vpop.f32.mrf.mxu0
        %v568 = vadd.f32 0.0, %v567
        %569 = vmatmul.bf16.gmra.mxu0 %v421
        %v570 = vpop.f32.mrf.mxu0
        %v571 = vadd.f32 0.0, %v570
        %v572 = vpop.f32.mrf.mxu0
        %v573 = vadd.f32 0.0, %v572
        %574 = vdwg.mxu0
        %v575 = vmax.f32 %v496, 0.0
        %v576 = vmax.f32 %v498, 0.0
        %v577 = vmax.f32 %v501, 0.0
        %v578 = vmax.f32 %v503, 0.0
        %v579 = vmax.f32 %v506, 0.0
        %v580 = vmax.f32 %v508, 0.0
        %v581 = vmax.f32 %v511, 0.0
        %v582 = vmax.f32 %v513, 0.0
        %v583 = vmax.f32 %v516, 0.0
        %v584 = vmax.f32 %v518, 0.0
        %v585 = vmax.f32 %v521, 0.0
        %v586 = vmax.f32 %v523, 0.0
        %v587 = vmax.f32 %v526, 0.0
        %v588 = vmax.f32 %v528, 0.0
        %v589 = vmax.f32 %v531, 0.0
        %v590 = vmax.f32 %v533, 0.0
        %v591 = vmax.f32 %v536, 0.0
        %v592 = vmax.f32 %v538, 0.0
        %v593 = vmax.f32 %v541, 0.0
        %v594 = vmax.f32 %v543, 0.0
        %v595 = vmax.f32 %v546, 0.0
        %v596 = vmax.f32 %v548, 0.0
        %v597 = vmax.f32 %v551, 0.0
        %v598 = vmax.f32 %v553, 0.0
        %v599 = vmax.f32 %v556, 0.0
        %v600 = vmax.f32 %v558, 0.0
        %v601 = vmax.f32 %v561, 0.0
        %v602 = vmax.f32 %v563, 0.0
        %v603 = vmax.f32 %v566, 0.0
        %v604 = vmax.f32 %v568, 0.0
        %v605 = vmax.f32 %v571, 0.0
        %v606 = vmax.f32 %v573, 0.0
        %v607 = vld [vmem:[#allocation2] sm:$0xff]
        %v608 = vld [vmem:[#allocation2 + $0x8] sm:$0xff]
        %v609 = vadd.f32 %v575, %v576
        %v610 = vadd.f32 %v609, %v577
        %v611 = vadd.f32 %v610, %v578
        %v612 = vadd.f32 %v611, %v579
        %v613 = vadd.f32 %v612, %v580
        %v614 = vadd.f32 %v613, %v581
        %v615 = vadd.f32 %v614, %v582
        %v616 = vadd.f32 %v615, %v583
        %v617 = vadd.f32 %v616, %v584
        %v618 = vadd.f32 %v617, %v585
        %v619 = vadd.f32 %v618, %v586
        %v620 = vadd.f32 %v619, %v587
        %v621 = vadd.f32 %v620, %v588
        %v622 = vadd.f32 %v621, %v589
        %v623 = vadd.f32 %v622, %v590
        %v624 = vadd.f32 %v591, %v592
        %v625 = vadd.f32 %v624, %v593
        %v626 = vadd.f32 %v625, %v594
        %v627 = vadd.f32 %v626, %v595
        %v628 = vadd.f32 %v627, %v596
        %v629 = vadd.f32 %v628, %v597
        %v630 = vadd.f32 %v629, %v598
        %v631 = vadd.f32 %v630, %v599
        %v632 = vadd.f32 %v631, %v600
        %v633 = vadd.f32 %v632, %v601
        %v634 = vadd.f32 %v633, %v602
        %v635 = vadd.f32 %v634, %v603
        %v636 = vadd.f32 %v635, %v604
        %v637 = vadd.f32 %v636, %v605
        %v638 = vadd.f32 %v637, %v606
        %v639 = vadd.f32 %v607, %v623
        %v640 = vadd.f32 %v608, %v638
        %641 = vst [vmem:[#allocation2] sm:$0xff] %v639
        %642 = vst [vmem:[#allocation2 + $0x8] sm:$0xff] %v640
        %p643 = scmp.eq.s32.totalorder %s25, 1
        // Predicated region
        $region53: #{tpu_custom_call.1} parent=35 // pred_check
          %p644 = pneg %p643
        $region54: #{tpu_custom_call.1} parent=35 // pred_check_branch
          %646 = sbr.rel (%p644) target = $region56
        $region55: #{tpu_custom_call.1} parent=35 // pred_region
          %v647 = vld [vmem:[#allocation2] sm:$0xff]
          %v648 = vld [vmem:[#allocation2 + $0x8] sm:$0xff]
          %v649 = vrot.slane %v647, 4
          %v650 = vadd.f32 %v647, %v649
          %v651 = vrot.slane %v650, 2
          %v652 = vadd.f32 %v650, %v651
          %v653 = vrot.slane %v652, 1
          %v654 = vadd.f32 %v652, %v653
          %v655 = vrot.slane %v648, 4
          %v656 = vadd.f32 %v648, %v655
          %v657 = vrot.slane %v656, 2
          %v658 = vadd.f32 %v656, %v657
          %v659 = vrot.slane %v658, 1
          %v660 = vadd.f32 %v658, %v659
          %v661 = vmul.f32 %v654, 0.00390625
          %v662 = vmul.f32 %v660, 0.00390625
          %v663 = vpack.c.bf16 %v661, %v661
          %v664 = vpack.c.bf16 %v662, %v662
          %v665 = vld [vmem:[#allocation8] sm:$0xf]
          %v666 = vld [vmem:[#allocation8 + $0x4] sm:$0xf]
          %v667 = vld [vmem:[#allocation8 + $0x8] sm:$0xf]
          %v668 = vld [vmem:[#allocation8 + $0xc] sm:$0xf]
          %v669 = vld [vmem:[#allocation8 + $0x10] sm:$0xf]
          %v670 = vld [vmem:[#allocation8 + $0x14] sm:$0xf]
          %v671 = vld [vmem:[#allocation8 + $0x18] sm:$0xf]
          %v672 = vld [vmem:[#allocation8 + $0x1c] sm:$0xf]
          %v673 = vld [vmem:[#allocation8 + $0x20] sm:$0xf]
          %v674 = vld [vmem:[#allocation8 + $0x24] sm:$0xf]
          %v675 = vld [vmem:[#allocation8 + $0x28] sm:$0xf]
          %v676 = vld [vmem:[#allocation8 + $0x2c] sm:$0xf]
          %v677 = vld [vmem:[#allocation8 + $0x30] sm:$0xf]
          %v678 = vld [vmem:[#allocation8 + $0x34] sm:$0xf]
          %v679 = vld [vmem:[#allocation8 + $0x38] sm:$0xf]
          %v680 = vld [vmem:[#allocation8 + $0x3c] sm:$0xf]
          %v681 = vld [vmem:[%s3] sm:$0x1]
          %v683 = vperm.slane %v681, 0
          %v687 = vunpack.c.l.b16 %v663
          %v688 = vunpack.c.l.b16 %v664
          %vm689 = vcmask 1041409
          %v690 = vsel %vm689, %v688, %v687
          %v691 = vpack.c.b16 %v690, %v690
          %v709 = vunpack.c.l.b16 %v665
          %v710 = vunpack.c.l.b16 %v666
          %v711 = vunpack.c.l.b16 %v667
          %v712 = vunpack.c.l.b16 %v668
          %v713 = vunpack.c.l.b16 %v669
          %v714 = vunpack.c.l.b16 %v670
          %v715 = vunpack.c.l.b16 %v671
          %v716 = vunpack.c.l.b16 %v672
          %v717 = vunpack.c.l.b16 %v673
          %v718 = vunpack.c.l.b16 %v674
          %v719 = vunpack.c.l.b16 %v675
          %v720 = vunpack.c.l.b16 %v676
          %v721 = vunpack.c.l.b16 %v677
          %v722 = vunpack.c.l.b16 %v678
          %v723 = vunpack.c.l.b16 %v679
          %v724 = vunpack.c.l.b16 %v680
          %v725 = vpack.c.b16 %v710, %v709
          %v726 = vpack.c.b16 %v712, %v711
          %v727 = vpack.c.b16 %v714, %v713
          %v728 = vpack.c.b16 %v716, %v715
          %v729 = vpack.c.b16 %v718, %v717
          %v730 = vpack.c.b16 %v720, %v719
          %v731 = vpack.c.b16 %v722, %v721
          %v732 = vpack.c.b16 %v724, %v723
          %741 = vmatpush.bf16.msra.mxu0 %v732
          %742 = vmatpush.bf16.msra.mxu0 %v731
          %743 = vmatpush.bf16.msra.mxu0 %v730
          %744 = vmatpush.bf16.msra.mxu0 %v729
          %745 = vmatpush.bf16.msra.mxu0 %v728
          %746 = vmatpush.bf16.msra.mxu0 %v727
          %747 = vmatpush.bf16.msra.mxu0 %v726
          %748 = vmatpush.bf16.msra.mxu0 %v725
          %749 = vmatmul.bf16.gmra.mxu0 %v691
          %v750 = vpop.f32.mrf.mxu0
          %v751 = vadd.f32 %v683, %v750
          %v752 = vpop.f32.mrf.mxu0
          %753 = vdwg.mxu0
          %754 = vst [vmem:[#allocation9] sm:$0x3] %v751
        $region56: #{tpu_custom_call.1} parent=35 // pred_fallthru
          _
        // Predicated region
        $region57: #{tpu_custom_call.1} parent=35 // pred_check
          %p755 = pneg %p141
        $region58: #{tpu_custom_call.1} parent=35 // pred_check_branch
          %757 = sbr.rel (%p755) target = $region60
        $region59: #{tpu_custom_call.1} parent=35 // pred_region
          %759 = vsyncadd [#allocation5], 0
          %s760 = smul.addr %s24, 2
          %s761 = scalar_lea.hbm %s4, %s760
          %s763 = sshll.u32 [#allocation9], 4
          %s764 = int_to_ptr.vmem [resolvable:$true] %s763
          %s765 = sshll.u32 %s761, 4
          %s766 = int_to_ptr.hbm [resolvable:$true] %s765
          %768 = dma.vmem_to_hbm [thread:$0]  %s764, 32, %s766, [#allocation5]
        $region60: #{tpu_custom_call.1} parent=35 // pred_fallthru
          _
        // Predicated region
        $region61: #{tpu_custom_call.1} parent=35 // pred_check
          %p769 = pneg %p141
        $region62: #{tpu_custom_call.1} parent=35 // pred_check_branch
          %771 = sbr.rel (%p769) target = $region64
        $region63: #{tpu_custom_call.1} parent=35 // pred_region
          %773 = dma.done [#allocation5], 32
        $region64: #{tpu_custom_call.1} parent=35 // pred_fallthru
          _
      $region36: #{tpu_custom_call.1} parent=5 // pred_fallthru
        _
      %p774 = scmp.le.s32.totalorder 2, %s15
      // Predicated region
      $region65: #{tpu_custom_call.1} parent=5 // pred_check
        %p775 = pneg %p774
      $region66: #{tpu_custom_call.1} parent=5 // pred_check_branch
        %777 = sbr.rel (%p775) target = $region68
      $region67: #{tpu_custom_call.1} parent=5 // pred_region
        %s778 = ssub.s32 %s15, 2
      $region68: #{tpu_custom_call.1} parent=5 // pred_fallthru
        _
    $region6: #{tpu_custom_call.1} parent=1 // loop_footer
      %s19 = sadd.s32 1, %s15
    $region7: #{tpu_custom_call.1} parent=1 // loop_footer_branch
      %14 = sbr.rel target = $region3
    $region8: #{tpu_custom_call.1} parent=1 // loop_exit
      _
    %779 = vsyncpa [#allocation4], 1
    %s780 = scalar_lea.sflag [#allocation4], 1
    %781 = vsyncpa %s780, 1
    %782 = vsyncpa [#allocation7], 1
    %783 = vsyncpa [#allocation5], 1
    %s784 = scalar_lea.sflag [#allocation5], 1
    %785 = vsyncpa %s784, 1

</llo_original>
